<compile_context>
chip_gen: v7x
topology: tpu7x:2x2x1
jax: 0.10.0
libtpu: 0.0.40
codegen_flags: <defaults>
</compile_context>

<pallas_src>
import functools

import jax
import jax.numpy as jnp
from jax.experimental import pallas as pl
from jax.experimental.pallas import tpu as pltpu


def _round_up(x, m):
    return ((x + m - 1) // m) * m


def _default_tile_rows():
    """Per-generation default row tile (amortize per-grid-step overhead vs HBM BW)."""
    try:
        kind = jax.devices()[0].device_kind.lower()
    except Exception:
        return 2048
    if "v7" in kind:
        return 8192
    if "v6" in kind:
        return 4096
    return 2048  # v5e (16 MiB scoped VMEM default) and older


def _fastspeech_loss_kernel(mel_out_ref, mel_tgt_ref, dur_pred_ref, dur_ref,
                            out_ref, acc_ref, *, tile_rows, tiles_per_split,
                            total_rows):
    c = pl.program_id(0)   # TensorCore split  ("parallel")
    i = pl.program_id(1)   # streamed mel tile ("arbitrary")

    @pl.when(i == 0)
    def _init():
        acc_ref[...] = jnp.zeros_like(acc_ref)

    # ---- hot loop: elementwise VPU work only, hidden under the mel-tile DMAs ----
    # Rows past the array extent (edge tile) or of a phantom tile (clamped index
    # map) hold unspecified VMEM data and MUST contribute exactly 0.
    start_row = (c * tiles_per_split + i) * tile_rows
    rem = total_rows - start_row                     # may be <= 0 or > tile_rows
    d = mel_out_ref[...].astype(jnp.float32) - mel_tgt_ref[...].astype(jnp.float32)
    row_ids = jax.lax.broadcasted_iota(jnp.int32, d.shape, 0)
    d = jnp.where(row_ids < rem, d, 0.0)
    n_cols = d.shape[1]
    # Free-view reshape (splits sublanes on vreg boundaries) + axis-0 VALU adds.
    acc_ref[...] += jnp.sum((d * d).reshape(tile_rows // 8, 8, n_cols), axis=0)

    @pl.when(i == pl.num_programs(1) - 1)
    def _finalize():
        # Single cross-lane/sublane reduce per split, once.
        out_ref[0, 0] = jnp.sum(acc_ref[...])
        dd = dur_pred_ref[...].astype(jnp.float32) - dur_ref[...].astype(jnp.float32)
        out_ref[0, 1] = jnp.sum(jnp.abs(dd))


def fastspeech_loss(mel_output, duration_predictor_output, mel_target, duration,
                    *, tile_rows=None):
    """Returns dict with 'loss', 'mel_loss', 'duration_loss' (float32 scalars)."""
    assert mel_output.shape == mel_target.shape
    assert duration_predictor_output.shape == duration.shape
    n_mel = mel_output.size
    n_dur = duration_predictor_output.size

    # Free row-major views: mel as (rows, n_mels), durations as (1, n_dur).
    n_cols = mel_output.shape[-1] if mel_output.ndim else 1
    mel_out2d = mel_output.reshape(-1, n_cols)
    mel_tgt2d = mel_target.reshape(-1, n_cols)
    rows = mel_out2d.shape[0]

    # Degenerate guard: keep at least 8 rows so an (8k, n_cols) block is legal.
    # Padded rows are zero in both tensors -> contribute 0 (and are masked anyway).
    if rows < 8:
        pad = 8 - rows
        mel_out2d = jnp.pad(mel_out2d, ((0, pad), (0, 0)))
        mel_tgt2d = jnp.pad(mel_tgt2d, ((0, pad), (0, 0)))
        rows = 8

    dur_pred2d = duration_predictor_output.reshape(1, n_dur)
    dur2d = duration.reshape(1, n_dur)

    if tile_rows is None:
        tile_rows = _default_tile_rows()
    # Multiple of 8 (keeps the in-kernel reshape a free view), no larger than
    # the 8-rounded row count, and capped so one pipelined buffer <= ~4 MiB.
    lane_padded = _round_up(n_cols, 128)
    vmem_row_cap = max(8, ((4 << 20) // (lane_padded * 4)) // 8 * 8)
    tile_rows = max(8, min(_round_up(tile_rows, 8), _round_up(rows, 8), vmem_row_cap))

    total_tiles = pl.cdiv(rows, tile_rows)
    num_splits = 2 if total_tiles >= 2 else 1   # v7x: one mel sub-stream per TensorCore
    tiles_per_split = pl.cdiv(total_tiles, num_splits)
    last_tile = total_tiles - 1

    def mel_index(c, i):
        # Clamp so a phantom tile of the second split stays in bounds; its rows
        # are fully masked in-kernel (rem <= 0).
        return (jnp.minimum(c * tiles_per_split + i, last_tile), 0)

    kernel = functools.partial(
        _fastspeech_loss_kernel,
        tile_rows=tile_rows,
        tiles_per_split=tiles_per_split,
        total_rows=rows,
    )

    mel_spec = pl.BlockSpec((tile_rows, n_cols), mel_index)
    dur_spec = pl.BlockSpec((1, n_dur), lambda c, i: (0, 0))   # resident, fetched once

    partials = pl.pallas_call(
        kernel,
        out_shape=jax.ShapeDtypeStruct((num_splits, 2), jnp.float32),
        grid=(num_splits, tiles_per_split),
        in_specs=[mel_spec, mel_spec, dur_spec, dur_spec],
        out_specs=pl.BlockSpec((1, 2), lambda c, i: (c, 0),
                               memory_space=pltpu.MemorySpace.SMEM),
        scratch_shapes=[pltpu.VMEM((8, n_cols), jnp.float32)],
        compiler_params=pltpu.CompilerParams(
            dimension_semantics=("parallel", "arbitrary")),
    )(mel_out2d, mel_tgt2d, dur_pred2d, dur2d)

    # Tiny scalar combine of the per-split partial sums + mean normalization.
    mel_loss = jnp.sum(partials[:, 0]) * (1.0 / n_mel)
    dur_loss = partials[0, 1] * (1.0 / n_dur)
    loss = mel_loss + dur_loss
    return {"loss": loss, "mel_loss": mel_loss, "duration_loss": dur_loss}


if __name__ == "__main__":
    key = jax.random.PRNGKey(0)
    k1, k2, k3, k4 = jax.random.split(key, 4)

    def _ref(mo, dp, mt, du):
        mel = jnp.mean((mo - mt) ** 2)
        dur = jnp.mean(jnp.abs(dp - du.astype(jnp.float32)))
        return mel, dur

    # Small FastSpeech-like shapes: (batch, frames, n_mels) mel, (batch, frames) durations.
    B, T, N_MELS = 2, 8, 32
    mel_output = jax.random.normal(k1, (B, T, N_MELS), dtype=jnp.float32)
    mel_target = jax.random.normal(k2, (B, T, N_MELS), dtype=jnp.float32)
    duration_predictor_output = jax.random.normal(k3, (B, T), dtype=jnp.float32)
    duration = jax.random.randint(k4, (B, T), 0, 10, dtype=jnp.int32)

    result = fastspeech_loss(mel_output, duration_predictor_output, mel_target, duration)
    jax.block_until_ready(result)

    ref_mel, ref_dur = _ref(mel_output, duration_predictor_output, mel_target, duration)
    assert jnp.allclose(result["mel_loss"], ref_mel, atol=1e-5, rtol=1e-5), result["mel_loss"]
    assert jnp.allclose(result["duration_loss"], ref_dur, atol=1e-5, rtol=1e-5), result["duration_loss"]
    assert jnp.allclose(result["loss"], ref_mel + ref_dur, atol=1e-5, rtol=1e-5), result["loss"]

    # Second check: exercises multi-tile streaming, the 2-way TensorCore split,
    # edge-tile masking and the clamped phantom tile (rows = 154, tile_rows = 32).
    B2, T2, N_MELS2 = 2, 77, 80
    m1 = jax.random.normal(k1, (B2, T2, N_MELS2), dtype=jnp.float32)
    m2 = jax.random.normal(k2, (B2, T2, N_MELS2), dtype=jnp.float32)
    dp = jax.random.normal(k3, (B2, T2), dtype=jnp.float32)
    du = jax.random.randint(k4, (B2, T2), 0, 10, dtype=jnp.int32)

    res2 = fastspeech_loss(m1, dp, m2, du, tile_rows=32)
    jax.block_until_ready(res2)
    ref_mel2, ref_dur2 = _ref(m1, dp, m2, du)
    assert jnp.allclose(res2["mel_loss"], ref_mel2, atol=1e-5, rtol=1e-5), res2["mel_loss"]
    assert jnp.allclose(res2["duration_loss"], ref_dur2, atol=1e-5, rtol=1e-5), res2["duration_loss"]
    assert jnp.allclose(res2["loss"], ref_mel2 + ref_dur2, atol=1e-5, rtol=1e-5), res2["loss"]

    print("KERNEL_OK")
</pallas_src>

<mosaic_0001>
module attributes {stable_mosaic.version = 11 : i64} {
  func.func @_fastspeech_loss_kernel(%arg0: i32, %arg1: i32, %arg2: memref<16x32xf32, #tpu.memory_space<vmem>>, %arg3: memref<16x32xf32, #tpu.memory_space<vmem>>, %arg4: memref<1x16xf32, #tpu.memory_space<vmem>>, %arg5: memref<1x16xi32, #tpu.memory_space<vmem>>, %arg6: memref<1x2xf32, #tpu.memory_space<smem>>, %arg7: memref<8x32xf32, #tpu.memory_space<vmem>>) attributes {dimension_semantics = [#tpu.dimension_semantics<parallel>, #tpu.dimension_semantics<arbitrary>], iteration_bounds = array<i64: 1, 1>, scalar_prefetch = 0 : i64, scratch_operands = 1 : i64, tpu.core_type = #tpu.core_type<tc>, window_params = [{transform_indices = @transform_0, window_bounds = array<i64: 16, 32>}, {transform_indices = @transform_1, window_bounds = array<i64: 16, 32>}, {pipeline_mode = #tpu.pipeline_mode<synchronous>, transform_indices = @transform_2, window_bounds = array<i64: 1, 16>}, {pipeline_mode = #tpu.pipeline_mode<synchronous>, transform_indices = @transform_3, window_bounds = array<i64: 1, 16>}, {transform_indices = @transform_4, window_bounds = array<i64: 1, 2>}]} {
    %c0_i32 = arith.constant 0 : i32
    %0 = arith.cmpi eq, %arg1, %c0_i32 : i32
    %1 = arith.extui %0 : i1 to i32
    %c0_i32_0 = arith.constant 0 : i32
    %2 = arith.cmpi ne, %1, %c0_i32_0 : i32
    scf.if %2 {
      %cst_12 = arith.constant 0.000000e+00 : f32
      %24 = vector.broadcast %cst_12 : f32 to vector<8x32xf32>
      %c0_13 = arith.constant 0 : index
      %c0_14 = arith.constant 0 : index
      %25 = vector.load %arg7[%c0_13, %c0_14] : memref<8x32xf32, #tpu.memory_space<vmem>>, vector<8x32xf32>
      tpu.vector_store %arg7[%c0_13, %c0_14], %24 {strides = array<i32>} : memref<8x32xf32, #tpu.memory_space<vmem>>, vector<8x32xf32>,
    } else {
    }
    %c1_i32 = arith.constant 1 : i32
    %3 = arith.muli %arg0, %c1_i32 : i32
    %4 = arith.addi %3, %arg1 : i32
    %c16_i32 = arith.constant 16 : i32
    %5 = arith.muli %4, %c16_i32 : i32
    %c16_i32_1 = arith.constant 16 : i32
    %6 = arith.subi %c16_i32_1, %5 : i32
    %c0 = arith.constant 0 : index
    %c0_2 = arith.constant 0 : index
    %7 = vector.load %arg2[%c0, %c0_2] : memref<16x32xf32, #tpu.memory_space<vmem>>, vector<16x32xf32>
    %c0_3 = arith.constant 0 : index
    %c0_4 = arith.constant 0 : index
    %8 = vector.load %arg3[%c0_3, %c0_4] : memref<16x32xf32, #tpu.memory_space<vmem>>, vector<16x32xf32>
    %9 = arith.subf %7, %8 : vector<16x32xf32>
    %10 = tpu.iota {dimensions = array<i32: 0>} : vector<16x32xi32>
    %11 = vector.broadcast %6 : i32 to vector<16x32xi32>
    %12 = arith.cmpi slt, %10, %11 : vector<16x32xi32>
    %cst = arith.constant 0.000000e+00 : f32
    %13 = vector.broadcast %cst : f32 to vector<16x32xf32>
    %14 = arith.select %12, %9, %13 : vector<16x32xi1>, vector<16x32xf32>
    %c0_5 = arith.constant 0 : index
    %c0_6 = arith.constant 0 : index
    %15 = vector.load %arg7[%c0_5, %c0_6] : memref<8x32xf32, #tpu.memory_space<vmem>>, vector<8x32xf32>
    %16 = arith.mulf %14, %14 : vector<16x32xf32>
    %17 = vector.shape_cast %16 : vector<16x32xf32> to vector<2x8x32xf32>
    %cst_7 = arith.constant dense<0.000000e+00> : vector<8x32xf32>
    %18 = vector.multi_reduction <add>, %17, %cst_7 [0] : vector<2x8x32xf32> to vector<8x32xf32>
    %19 = arith.addf %15, %18 : vector<8x32xf32>
    %c0_8 = arith.constant 0 : index
    %c0_9 = arith.constant 0 : index
    %20 = vector.load %arg7[%c0_8, %c0_9] : memref<8x32xf32, #tpu.memory_space<vmem>>, vector<8x32xf32>
    tpu.vector_store %arg7[%c0_8, %c0_9], %19 {strides = array<i32>} : memref<8x32xf32, #tpu.memory_space<vmem>>, vector<8x32xf32>,
    %c0_i32_10 = arith.constant 0 : i32
    %21 = arith.cmpi eq, %arg1, %c0_i32_10 : i32
    %22 = arith.extui %21 : i1 to i32
    %c0_i32_11 = arith.constant 0 : i32
    %23 = arith.cmpi ne, %22, %c0_i32_11 : i32
    scf.if %23 {
      %c0_12 = arith.constant 0 : index
      %c0_13 = arith.constant 0 : index
      %24 = vector.load %arg7[%c0_12, %c0_13] : memref<8x32xf32, #tpu.memory_space<vmem>>, vector<8x32xf32>
      %25 = vector.shape_cast %24 : vector<8x32xf32> to vector<1x8x32xf32>
      %cst_14 = arith.constant dense<0.000000e+00> : vector<1xf32>
      %26 = vector.multi_reduction <add>, %25, %cst_14 [1, 2] : vector<1x8x32xf32> to vector<1xf32>
      %27 = vector.shape_cast %26 : vector<1xf32> to vector<1x1x1xf32>
      %28 = vector.extract %27[0, 0, 0] : f32 from vector<1x1x1xf32>
      %c0_15 = arith.constant 0 : index
      %c0_16 = arith.constant 0 : index
      %29 = memref.load %arg6[%c0_15, %c0_16] : memref<1x2xf32, #tpu.memory_space<smem>>
      memref.store %28, %arg6[%c0_15, %c0_16] : memref<1x2xf32, #tpu.memory_space<smem>>
      %c0_17 = arith.constant 0 : index
      %c0_18 = arith.constant 0 : index
      %30 = vector.load %arg4[%c0_17, %c0_18] : memref<1x16xf32, #tpu.memory_space<vmem>>, vector<1x16xf32>
      %c0_19 = arith.constant 0 : index
      %c0_20 = arith.constant 0 : index
      %31 = vector.load %arg5[%c0_19, %c0_20] : memref<1x16xi32, #tpu.memory_space<vmem>>, vector<1x16xi32>
      %32 = arith.sitofp %31 : vector<1x16xi32> to vector<1x16xf32>
      %33 = arith.subf %30, %32 : vector<1x16xf32>
      %34 = math.absf %33 : vector<1x16xf32>
      %35 = vector.shape_cast %34 : vector<1x16xf32> to vector<1x1x16xf32>
      %cst_21 = arith.constant dense<0.000000e+00> : vector<1xf32>
      %36 = vector.multi_reduction <add>, %35, %cst_21 [1, 2] : vector<1x1x16xf32> to vector<1xf32>
      %37 = vector.shape_cast %36 : vector<1xf32> to vector<1x1x1xf32>
      %38 = vector.extract %37[0, 0, 0] : f32 from vector<1x1x1xf32>
      %c0_22 = arith.constant 0 : index
      %c1 = arith.constant 1 : index
      %39 = memref.load %arg6[%c0_22, %c1] : memref<1x2xf32, #tpu.memory_space<smem>>
      memref.store %38, %arg6[%c0_22, %c1] : memref<1x2xf32, #tpu.memory_space<smem>>
    } else {
    }
    return
  }
  func.func @transform_0(%arg0: i32, %arg1: i32) -> (i32, i32) {
    %c1_i32 = arith.constant 1 : i32
    %0 = arith.muli %arg0, %c1_i32 : i32
    %1 = arith.addi %0, %arg1 : i32
    %c0_i32 = arith.constant 0 : i32
    %2 = arith.minsi %1, %c0_i32 : i32
    %c0_i32_0 = arith.constant 0 : i32
    %c0_i32_1 = arith.constant 0 : i32
    return %2, %c0_i32_0 : i32, i32
  }
  func.func @transform_1(%arg0: i32, %arg1: i32) -> (i32, i32) {
    %c1_i32 = arith.constant 1 : i32
    %0 = arith.muli %arg0, %c1_i32 : i32
    %1 = arith.addi %0, %arg1 : i32
    %c0_i32 = arith.constant 0 : i32
    %2 = arith.minsi %1, %c0_i32 : i32
    %c0_i32_0 = arith.constant 0 : i32
    %c0_i32_1 = arith.constant 0 : i32
    return %2, %c0_i32_0 : i32, i32
  }
  func.func @transform_2(%arg0: i32, %arg1: i32) -> (i32, i32) {
    %c0_i32 = arith.constant 0 : i32
    %c0_i32_0 = arith.constant 0 : i32
    %c0_i32_1 = arith.constant 0 : i32
    return %c0_i32, %c0_i32_0 : i32, i32
  }
  func.func @transform_3(%arg0: i32, %arg1: i32) -> (i32, i32) {
    %c0_i32 = arith.constant 0 : i32
    %c0_i32_0 = arith.constant 0 : i32
    %c0_i32_1 = arith.constant 0 : i32
    return %c0_i32, %c0_i32_0 : i32, i32
  }
  func.func @transform_4(%arg0: i32, %arg1: i32) -> (i32, i32) {
    %c0_i32 = arith.constant 0 : i32
    %c0_i32_0 = arith.constant 0 : i32
    return %arg0, %c0_i32 : i32, i32
  }
}

</mosaic_0001>

<llo_original>
// kernel: tpu_custom_call.1
$region0: #{tpu_custom_call.1}
  #allocation0 [shape = 'u32[]', space=smem, size = 0x4, offset = 0x4, fixed_abs, tag = 'smem constant byte address 0x4 - core index']
  #allocation1 [shape = 'u32[144,128]{1,0:T(1,128)}', space=vmem, size = 0x12000, scoped, tag = 'internal scratch']
  #allocation2 [shape = 'f32[8,32]{1,0:T(8,128)}', space=vmem, size = 0x1000, scoped, tag = 'scratch operand']
  %s0 = inlined_call_operand.hbm [shape: f32[16,32], index: 0, kind: input, shape index: {}]
  %s1 = inlined_call_operand.hbm [shape: f32[16,32], index: 1, kind: input, shape index: {}]
  %s2 = inlined_call_operand.vmem [shape: f32[1,16], index: 2, kind: input, shape index: {}]
  %s3 = inlined_call_operand.vmem [shape: s32[1,16], index: 3, kind: input, shape index: {}]
  %s4 = inlined_call_operand.hbm [shape: f32[1,2], index: 4, kind: output, shape index: {}]
  %s5 = sld [smem:[#allocation0]]
  $region42: #{tpu_custom_call.1} parent=0
    _
  %s7 = ssub.s32 1, %s5
  %s8 = scalar_select 0, %s7, %s5
  $region1: #{tpu_custom_call.1} parent=0
    #allocation3 [shape = 'u8[8192]{0}', space=vmem, size = 0x2000, scoped, tag = 'input window, operand 0, single buffered']
    #allocation4 [shape = 's32[1]{0}', space=sflag, size = 0x4, scoped, tag = 'scoped memory for tpu_custom_call.1']
    #allocation5 [shape = 's32[1]{0}', space=sflag, size = 0x4, scoped, tag = 'scoped memory for tpu_custom_call.1']
    #allocation6 [shape = 'u8[8192]{0}', space=vmem, size = 0x2000, scoped, tag = 'input window, operand 1, single buffered']
    #allocation7 [shape = 's32[1]{0}', space=sflag, size = 0x4, scoped, tag = 'scoped memory for tpu_custom_call.1']
    #allocation8 [shape = 'u8[512]{0}', space=smem, size = 0x200, scoped, tag = 'output window, operand 0, single buffered']
    %9 = vsyncpa [#allocation4], 0
    %10 = vsyncpa [#allocation7], 0
    %11 = vsyncpa [#allocation5], 0
    // Predicated region
    $region2: #{tpu_custom_call.1} parent=1 // pred_check
      _
    $region3: #{tpu_custom_call.1} parent=1 // pred_check_branch
      %13 = sbr.rel (0) target = $region5
    $region4: #{tpu_custom_call.1} parent=1 // pred_region
      %s14 = sadd.s32 0, 0
      %p15 = scmp.lt.s32.totalorder %s14, 0
      %s16 = scalar_select %p15, %s14, 0
      %s17 = smul.u32 2, %s16
      %s19 = ssub.s32 256, 256
      %20 = vsyncadd [#allocation4], %s19
      %s21 = smul.addr %s17, 128
      %s22 = scalar_lea.hbm %s0, %s21
      %s23 = sshll.u32 [#allocation3], 4
      %s24 = int_to_ptr.vmem [resolvable:$true] %s23
      %29 = dma.hbm_to_vmem [thread:$0]  %s22, 256, %s24, [#allocation4], 128, 128, 8
    $region5: #{tpu_custom_call.1} parent=1 // pred_fallthru
      _
    // Predicated region
    $region6: #{tpu_custom_call.1} parent=1 // pred_check
      _
    $region7: #{tpu_custom_call.1} parent=1 // pred_check_branch
      %31 = sbr.rel (0) target = $region9
    $region8: #{tpu_custom_call.1} parent=1 // pred_region
      %s32 = sadd.s32 0, 0
      %p33 = scmp.lt.s32.totalorder %s32, 0
      %s34 = scalar_select %p33, %s32, 0
      %s35 = smul.u32 2, %s34
      %s37 = ssub.s32 256, 256
      %38 = vsyncadd [#allocation7], %s37
      %s39 = smul.addr %s35, 128
      %s40 = scalar_lea.hbm %s1, %s39
      %s41 = sshll.u32 [#allocation6], 4
      %s42 = int_to_ptr.vmem [resolvable:$true] %s41
      %47 = dma.hbm_to_vmem [thread:$0]  %s40, 256, %s42, [#allocation7], 128, 128, 8
    $region9: #{tpu_custom_call.1} parent=1 // pred_fallthru
      _
    // Predicated region
    $region10: #{tpu_custom_call.1} parent=1 // pred_check
      _
    $region11: #{tpu_custom_call.1} parent=1 // pred_check_branch
      %49 = sbr.rel (0) target = $region13
    $region12: #{tpu_custom_call.1} parent=1 // pred_region
      _
    $region13: #{tpu_custom_call.1} parent=1 // pred_fallthru
      _
    // Predicated region
    $region14: #{tpu_custom_call.1} parent=1 // pred_check
      _
    $region15: #{tpu_custom_call.1} parent=1 // pred_check_branch
      %51 = sbr.rel (0) target = $region17
    $region16: #{tpu_custom_call.1} parent=1 // pred_region
      _
    $region17: #{tpu_custom_call.1} parent=1 // pred_fallthru
      _
    // Predicated region
    $region18: #{tpu_custom_call.1} parent=1 // pred_check
      _
    $region19: #{tpu_custom_call.1} parent=1 // pred_check_branch
      %53 = sbr.rel (0) target = $region21
    $region20: #{tpu_custom_call.1} parent=1 // pred_region
      %54 = dma.done [#allocation4], 256
    $region21: #{tpu_custom_call.1} parent=1 // pred_fallthru
      _
    // Predicated region
    $region22: #{tpu_custom_call.1} parent=1 // pred_check
      _
    $region23: #{tpu_custom_call.1} parent=1 // pred_check_branch
      %56 = sbr.rel (0) target = $region25
    $region24: #{tpu_custom_call.1} parent=1 // pred_region
      %57 = dma.done [#allocation7], 256
    $region25: #{tpu_custom_call.1} parent=1 // pred_fallthru
      _
    %s58 = sadd.s32 0, 0
    %p59 = scmp.lt.s32.totalorder %s58, 0
    %s60 = scalar_select %p59, %s58, 0
    %s61 = smul.u32 2, %s60
    %s62 = sadd.s32 0, 0
    %p63 = scmp.lt.s32.totalorder %s62, 0
    %s64 = scalar_select %p63, %s62, 0
    %s65 = smul.u32 2, %s64
    %p66 = scmp.eq.s32.totalorder 0, 0
    // Predicated region
    $region26: #{tpu_custom_call.1} parent=1 // pred_check
      %p67 = pneg %p66
    $region27: #{tpu_custom_call.1} parent=1 // pred_check_branch
      %69 = sbr.rel (%p67) target = $region29
    $region28: #{tpu_custom_call.1} parent=1 // pred_region
      %vm70 = vcmask 261120
      %71 = vst.msk [vmem:[#allocation2] sm:$0xff] %vm70, 0.0
    $region29: #{tpu_custom_call.1} parent=1 // pred_fallthru
      _
    %s72 = sadd.s32 0, 0
    %s73 = smul.u32 %s72, 16
    %s74 = ssub.s32 16, %s73
    %v75 = vld [vmem:[#allocation3] sm:$0xff]
    %v76 = vld [vmem:[#allocation3 + $0x8] sm:$0xff]
    %v77 = vld [vmem:[#allocation6] sm:$0xff]
    %v78 = vld [vmem:[#allocation6 + $0x8] sm:$0xff]
    %v79 = vsub.f32 %v75, %v77
    %v80 = vsub.f32 %v76, %v78
    %v81 = vlaneseq
    %v82 = vshrl.u32 %v81, 7
    %v83 = vadd.s32 %v82, 8
    %v84 = vstv %s74
    %vm85 = vcmp.lt.s32.totalorder %v82, %v84
    %vm86 = vcmp.lt.s32.totalorder %v83, %v84
    %v87 = vsel %vm85, %v79, 0.0
    %v88 = vsel %vm86, %v80, 0.0
    %v89 = vld [vmem:[#allocation2] sm:$0xff]
    %v90 = vmul.f32 %v87, %v87
    %v91 = vmul.f32 %v88, %v88
    %vm92 = vcmask 261120
    %v93 = vsel %vm92, %v90, 0.0
    %v94 = vsel %vm92, %v91, 0.0
    %v95 = vadd.f32 %v93, %v94
    %v96 = vadd.f32 %v89, %v95
    %97 = vst.msk [vmem:[#allocation2] sm:$0xff] %vm92, %v96
    // Predicated region
    $region30: #{tpu_custom_call.1} parent=1 // pred_check
      %p98 = pneg %p66
    $region31: #{tpu_custom_call.1} parent=1 // pred_check_branch
      %100 = sbr.rel (%p98) target = $region33
    $region32: #{tpu_custom_call.1} parent=1 // pred_region
      %v101 = vld [vmem:[#allocation2] sm:$0xff]
      %v102 = vsel %vm92, %v101, 0.0
      %103 = vadd.xlane.f32.xlu0 %v102
      %v104 = vpop.xlane.xlu0 %103
      %v105 = vrot.slane %v104, 4
      %v106 = vadd.f32 %v104, %v105
      %v107 = vrot.slane %v106, 2
      %v108 = vadd.f32 %v106, %v107
      %v109 = vrot.slane %v108, 1
      %v110 = vadd.f32 %v108, %v109
      %s111 = vtos %v110
      %s112 = scalar_lea.smem [#allocation8], 0
      %113 = sst [smem:[%s112]] %s111
      %v114 = vld [vmem:[%s2] sm:$0x1]
      %v115 = vld [vmem:[%s3] sm:$0x1]
      %v116 = vcvt.s32.f32 %v115
      %v117 = vsub.f32 %v114, %v116
      %v118 = vand.u32 2147483647, %v117
      %vm119 = vcmask 122880
      %v120 = vsel %vm119, %v118, 0.0
      %121 = vadd.xlane.f32.xlu0 %v120
      %v122 = vpop.xlane.xlu0 %121
      %v123 = vrot.slane %v122, 4
      %v124 = vadd.f32 %v122, %v123
      %v125 = vrot.slane %v124, 2
      %v126 = vadd.f32 %v124, %v125
      %v127 = vrot.slane %v126, 1
      %v128 = vadd.f32 %v126, %v127
      %s129 = vtos %v128
      %s130 = scalar_lea.smem [#allocation8], 1
      %131 = sst [smem:[%s130]] %s129
    $region33: #{tpu_custom_call.1} parent=1 // pred_fallthru
      _
    // Predicated region
    $region34: #{tpu_custom_call.1} parent=1 // pred_check
      _
    $region35: #{tpu_custom_call.1} parent=1 // pred_check_branch
      %133 = sbr.rel (0) target = $region37
    $region36: #{tpu_custom_call.1} parent=1 // pred_region
      %s135 = ssub.s32 16, 16
      %136 = vsyncadd [#allocation5], %s135
      %139 = dma.smem_to_hbm [#allocation8], 16, %s4, [#allocation5]
    $region37: #{tpu_custom_call.1} parent=1 // pred_fallthru
      _
    // Predicated region
    $region38: #{tpu_custom_call.1} parent=1 // pred_check
      _
    $region39: #{tpu_custom_call.1} parent=1 // pred_check_branch
      %141 = sbr.rel (0) target = $region41
    $region40: #{tpu_custom_call.1} parent=1 // pred_region
      %142 = dma.done [#allocation5], 16
    $region41: #{tpu_custom_call.1} parent=1 // pred_fallthru
      _
    %143 = sfence
    %144 = vsyncpa [#allocation4], 1
    %145 = vsyncpa [#allocation7], 1
    %146 = vsyncpa [#allocation5], 1

</llo_original>
